<compile_context>
chip_gen: v6e
topology: v6e:2x2x1
jax: 0.10.0
libtpu: 0.0.40
codegen_flags: <defaults>
</compile_context>

<pallas_src>
import functools

import numpy as np
import jax
import jax.numpy as jnp
from jax.experimental import pallas as pl
from jax.experimental.pallas import tpu as pltpu


def _round_up(x, m):
    return ((x + m - 1) // m) * m


def _cdiv(a, b):
    return -(-a // b)


def _gelu_tanh(x):
    # gelu_pytorch_tanh: 0.5*x*(1 + tanh(sqrt(2/pi) * x * (1 + 0.044715*x^2)))
    c = 0.7978845608028654  # sqrt(2/pi)
    x2 = x * x
    return 0.5 * x * (1.0 + jnp.tanh(c * x * (1.0 + 0.044715 * x2)))


# ---------------------------------------------------------------------------
# Kernel body: one M tile (grid axis 0) x one I chunk (grid axis 1).
# ---------------------------------------------------------------------------
def mlp_kernel(x_ref, w1_ref, b1_ref, w2_ref, b2_ref, o_ref, acc_ref):
    j = pl.program_id(1)

    @pl.when(j == 0)
    def _init():
        # Fold the fc2 bias into the f32 accumulator (saves a tm x H add later).
        acc_ref[...] = jnp.broadcast_to(b2_ref[...], acc_ref.shape)

    # fc1 chunk: [tm, H] @ [H, tk] -> f32 on the MXU; bias + gelu in f32
    # (VPU + EUP tanh).
    h = jnp.dot(x_ref[...], w1_ref[...], preferred_element_type=jnp.float32)
    h = _gelu_tanh(h + b1_ref[...])

    # fc2 partial: [tm, tk] @ [tk, H] accumulated into the f32 scratch.
    acc_ref[...] += jnp.dot(h.astype(w2_ref.dtype), w2_ref[...],
                            preferred_element_type=jnp.float32)

    @pl.when(j == pl.num_programs(1) - 1)
    def _finalize():
        o_ref[...] = acc_ref[...].astype(o_ref.dtype)


# ---------------------------------------------------------------------------
# One-time weight preparation (run at model-load time, NOT per call).
# ---------------------------------------------------------------------------
def prepare_idefics2_mlp_weights(w1, b1, w2, b2, compute_dtype=jnp.bfloat16):
    """Cast matmul weights to `compute_dtype` and pad I to a multiple of 128.

    Layout: w1 [H, I], b1 [I], w2 [I, H], b2 [H] (transposed nn.Linear
    weights). Zero padding of the I axis is exact: gelu(0) = 0 and the padded
    W2 rows are zero, so padded columns contribute nothing to the output.
    """
    H, I = w1.shape
    I_pad = _round_up(I, 128)
    w1c = w1.astype(compute_dtype)
    w2c = w2.astype(compute_dtype)
    b1f = b1.astype(jnp.float32).reshape(1, I)
    b2f = b2.astype(jnp.float32).reshape(1, H)
    if I_pad != I:
        w1c = jnp.pad(w1c, ((0, 0), (0, I_pad - I)))
        b1f = jnp.pad(b1f, ((0, 0), (0, I_pad - I)))
        w2c = jnp.pad(w2c, ((0, I_pad - I), (0, 0)))
    return w1c, b1f, w2c, b2f


# ---------------------------------------------------------------------------
# Per-generation tile / VMEM configuration.
#   (tm_target, tk_target, vmem_limit_bytes, vmem_budget_bytes, megacore)
# ---------------------------------------------------------------------------
_GEN_CONFIG = {
    "v5e": (512, 2304, 64 << 20, 56 << 20, False),
    "v6e": (1024, 2304, 100 << 20, 88 << 20, False),
    "v7x": (768, 2304, 52 << 20, 46 << 20, True),
    "default": (512, 2304, 48 << 20, 42 << 20, True),
}


def _device_generation():
    try:
        kind = jax.devices()[0].device_kind.lower()
    except Exception:
        return "default"
    if "v5 lite" in kind or "v5e" in kind or "v5lite" in kind:
        return "v5e"
    if "v6" in kind:
        return "v6e"
    if "v7" in kind:
        return "v7x"
    return "default"


def _pick_tk(i_pad, tk_target):
    """Largest 128-aligned divisor of i_pad that is <= tk_target."""
    n = i_pad // 128
    best = 128
    for d in range(1, n + 1):
        if n % d == 0 and 128 * d <= tk_target:
            best = 128 * d
    return best


def _vmem_estimate(tm, tk, h, cbytes, obytes):
    """Rough VMEM working set: double-buffered tiles plus the implicit f32 `h`
    intermediate (and its compute-dtype cast) the compiler allocates."""
    x_tile = 2 * tm * h * cbytes
    w_tiles = 2 * 2 * h * tk * cbytes          # W1 + W2 chunks, double buffered
    bias = 2 * (tk + h) * 4
    out_tile = 2 * tm * h * obytes
    acc = tm * h * 4
    interm = tm * tk * (4 + cbytes)            # f32 h + bf16 cast of h
    return x_tile + w_tiles + bias + out_tile + acc + interm


def _pick_tiles(m, h, i_pad, cbytes, obytes):
    gen = _device_generation()
    tm_target, tk_target, vmem_limit, vmem_budget, megacore = _GEN_CONFIG[gen]

    tk = _pick_tk(i_pad, tk_target)
    tm = min(tm_target, _round_up(m, 16))

    # Shrink tiles until the explicitly budgeted VMEM working set fits.
    while _vmem_estimate(tm, tk, h, cbytes, obytes) > vmem_budget:
        if tm > 64:
            tm = max(64, (tm // 2 // 16) * 16)
        elif tk > 128:
            tk = _pick_tk(i_pad, tk // 2)
        else:
            break

    num_m = _cdiv(m, tm)
    # v7x megacore: keep num_m even so the "parallel" M axis splits evenly
    # across the two TensorCores (avoids a single-core tail).
    if megacore and num_m > 1 and num_m % 2 == 1:
        num_m += 1
        tm = _round_up(_cdiv(m, num_m), 64)
    m_pad = num_m * tm
    num_i = i_pad // tk
    return tm, tk, num_m, num_i, m_pad, vmem_limit


# ---------------------------------------------------------------------------
# Jitted pallas_call wrapper (tiles are static / trace-time constants).
# ---------------------------------------------------------------------------
@functools.partial(
    jax.jit,
    static_argnames=("tm", "tk", "num_m", "num_i", "m_pad", "out_dtype_name",
                     "vmem_limit"))
def _mlp_pallas_call(x2d, w1c, b1f, w2c, b2f, *, tm, tk, num_m, num_i, m_pad,
                     out_dtype_name, vmem_limit):
    m, h = x2d.shape
    i_pad = w1c.shape[1]
    out_dtype = np.dtype(out_dtype_name)
    if m_pad != m:
        # Zero-padded M rows are sliced off below (gelu(0) etc. are harmless).
        x2d = jnp.pad(x2d, ((0, m_pad - m), (0, 0)))

    cbytes = np.dtype(w1c.dtype).itemsize
    obytes = out_dtype.itemsize
    cost = pl.CostEstimate(
        flops=4 * m_pad * h * i_pad,           # two matmuls
        transcendentals=m_pad * i_pad,         # one tanh per intermediate elem
        # Under the chunked scheme the weights (and b1) are streamed once per
        # M tile; activations are read/written once.
        bytes_accessed=(num_m * 2 * h * i_pad * cbytes
                        + num_m * (i_pad + h) * 4
                        + m_pad * h * (cbytes + obytes)),
    )

    out2d = pl.pallas_call(
        mlp_kernel,
        out_shape=jax.ShapeDtypeStruct((m_pad, h), out_dtype),
        grid_spec=pltpu.PrefetchScalarGridSpec(
            num_scalar_prefetch=0,
            grid=(num_m, num_i),
            in_specs=[
                pl.BlockSpec((tm, h), lambda i, j: (i, 0)),   # x tile (resident over j)
                pl.BlockSpec((h, tk), lambda i, j: (0, j)),   # W1 chunk
                pl.BlockSpec((1, tk), lambda i, j: (0, j)),   # b1 chunk (f32)
                pl.BlockSpec((tk, h), lambda i, j: (j, 0)),   # W2 chunk
                pl.BlockSpec((1, h), lambda i, j: (0, 0)),    # b2 (invariant, f32)
            ],
            out_specs=pl.BlockSpec((tm, h), lambda i, j: (i, 0)),
            scratch_shapes=[pltpu.VMEM((tm, h), jnp.float32)],  # f32 accumulator
        ),
        compiler_params=pltpu.CompilerParams(
            dimension_semantics=("parallel", "arbitrary"),
            vmem_limit_bytes=vmem_limit,
        ),
        cost_estimate=cost,
    )(x2d, w1c, b1f, w2c, b2f)
    return out2d[:m]


def idefics2_vision_mlp(hidden_states, w1c, b1f, w2c, b2f, *, out_dtype=None):
    """Fused Idefics2VisionMLP forward.

    hidden_states: [..., H]. Weights must come from
    prepare_idefics2_mlp_weights (pre-cast, I pre-padded to a multiple of 128).
    """
    *lead, h = hidden_states.shape
    m = 1
    for d in lead:
        m *= d
    out_dtype = hidden_states.dtype if out_dtype is None else out_dtype
    compute_dtype = w1c.dtype
    i_pad = w1c.shape[1]

    tm, tk, num_m, num_i, m_pad, vmem_limit = _pick_tiles(
        m, h, i_pad,
        np.dtype(compute_dtype).itemsize, np.dtype(out_dtype).itemsize)

    x2d = hidden_states.reshape(m, h).astype(compute_dtype)
    out2d = _mlp_pallas_call(
        x2d, w1c, b1f, w2c, b2f,
        tm=tm, tk=tk, num_m=num_m, num_i=num_i, m_pad=m_pad,
        out_dtype_name=np.dtype(out_dtype).name, vmem_limit=vmem_limit)
    return out2d.reshape(*lead, h)


if __name__ == "__main__":
    # Small synthetic config consistent with the module:
    # hidden_size=32, intermediate_size=128, batch=2, seq=8 (M = 16 tokens).
    B, S, H, I = 2, 8, 32, 128

    key = jax.random.PRNGKey(0)
    kx, kw1, kb1, kw2, kb2 = jax.random.split(key, 5)

    x = jax.random.normal(kx, (B, S, H), dtype=jnp.float32)
    # Weights in [in, out] layout (i.e. transposed nn.Linear weights).
    w1 = jax.random.normal(kw1, (H, I), dtype=jnp.float32) * 0.05
    b1 = jax.random.normal(kb1, (I,), dtype=jnp.float32) * 0.05
    w2 = jax.random.normal(kw2, (I, H), dtype=jnp.float32) * 0.05
    b2 = jax.random.normal(kb2, (H,), dtype=jnp.float32) * 0.05

    # One-time weight preparation (load-time in a real model, not per call).
    w1c, b1f, w2c, b2f = prepare_idefics2_mlp_weights(w1, b1, w2, b2)

    out = idefics2_vision_mlp(x, w1c, b1f, w2c, b2f)
    out = jax.block_until_ready(out)

    # Pure-JAX f32 reference. Tolerance loosened for bf16 matmul inputs
    # (f32 accumulation keeps the error small).
    h_ref = x.reshape(-1, H) @ w1 + b1
    h_ref = _gelu_tanh(h_ref)
    ref = (h_ref @ w2 + b2).reshape(B, S, H)
    assert jnp.allclose(out, ref, atol=2e-2, rtol=2e-2), "mismatch vs reference"

    print("KERNEL_OK")
</pallas_src>

<mosaic_0001>
module attributes {stable_mosaic.version = 11 : i64} {
  func.func @mlp_kernel(%arg0: i32, %arg1: i32, %arg2: memref<16x32xbf16, #tpu.memory_space<vmem>>, %arg3: memref<32x128xbf16, #tpu.memory_space<vmem>>, %arg4: memref<1x128xf32, #tpu.memory_space<vmem>>, %arg5: memref<128x32xbf16, #tpu.memory_space<vmem>>, %arg6: memref<1x32xf32, #tpu.memory_space<vmem>>, %arg7: memref<16x32xf32, #tpu.memory_space<vmem>>, %arg8: memref<16x32xf32, #tpu.memory_space<vmem>>) attributes {dimension_semantics = [#tpu.dimension_semantics<parallel>, #tpu.dimension_semantics<arbitrary>], iteration_bounds = array<i64: 1, 1>, scalar_prefetch = 0 : i64, scratch_operands = 1 : i64, tpu.core_type = #tpu.core_type<tc>, window_params = [{transform_indices = @transform_0, window_bounds = array<i64: 16, 32>}, {transform_indices = @transform_1, window_bounds = array<i64: 32, 128>}, {transform_indices = @transform_2, window_bounds = array<i64: 1, 128>}, {transform_indices = @transform_3, window_bounds = array<i64: 128, 32>}, {pipeline_mode = #tpu.pipeline_mode<synchronous>, transform_indices = @transform_4, window_bounds = array<i64: 1, 32>}, {transform_indices = @transform_5, window_bounds = array<i64: 16, 32>}]} {
    %c0_i32 = arith.constant 0 : i32
    %0 = arith.cmpi eq, %arg1, %c0_i32 : i32
    %1 = arith.extui %0 : i1 to i32
    %c0_i32_0 = arith.constant 0 : i32
    %2 = arith.cmpi ne, %1, %c0_i32_0 : i32
    scf.if %2 {
      %c0_20 = arith.constant 0 : index
      %c0_21 = arith.constant 0 : index
      %32 = vector.load %arg6[%c0_20, %c0_21] : memref<1x32xf32, #tpu.memory_space<vmem>>, vector<1x32xf32>
      %33 = vector.shape_cast %32 : vector<1x32xf32> to vector<1x32xf32>
      %34 = vector.broadcast %33 : vector<1x32xf32> to vector<16x32xf32>
      %c0_22 = arith.constant 0 : index
      %c0_23 = arith.constant 0 : index
      %35 = vector.load %arg8[%c0_22, %c0_23] : memref<16x32xf32, #tpu.memory_space<vmem>>, vector<16x32xf32>
      tpu.vector_store %arg8[%c0_22, %c0_23], %34 {strides = array<i32>} : memref<16x32xf32, #tpu.memory_space<vmem>>, vector<16x32xf32>,
    } else {
    }
    %c0 = arith.constant 0 : index
    %c0_1 = arith.constant 0 : index
    %3 = vector.load %arg2[%c0, %c0_1] : memref<16x32xbf16, #tpu.memory_space<vmem>>, vector<16x32xbf16>
    %c0_2 = arith.constant 0 : index
    %c0_3 = arith.constant 0 : index
    %4 = vector.load %arg3[%c0_2, %c0_3] : memref<32x128xbf16, #tpu.memory_space<vmem>>, vector<32x128xbf16>
    %cst = arith.constant dense<0.000000e+00> : vector<16x128xf32>
    %5 = tpu.matmul %3, %4, %cst {dimension_numbers = #tpu.dot_dimension_numbers<[1], [0], [0], [1], [0, 0, 1, 1], [], []>} : vector<16x32xbf16>, vector<32x128xbf16>, vector<16x128xf32> -> vector<16x128xf32>
    %c0_4 = arith.constant 0 : index
    %c0_5 = arith.constant 0 : index
    %6 = vector.load %arg4[%c0_4, %c0_5] : memref<1x128xf32, #tpu.memory_space<vmem>>, vector<1x128xf32>
    %7 = vector.broadcast %6 : vector<1x128xf32> to vector<16x128xf32>
    %8 = arith.addf %5, %7 : vector<16x128xf32>
    %9 = arith.mulf %8, %8 : vector<16x128xf32>
    %cst_6 = arith.constant 5.000000e-01 : f32
    %10 = vector.broadcast %cst_6 : f32 to vector<16x128xf32>
    %11 = arith.mulf %10, %8 : vector<16x128xf32>
    %cst_7 = arith.constant 0.797884583 : f32
    %12 = vector.broadcast %cst_7 : f32 to vector<16x128xf32>
    %13 = arith.mulf %12, %8 : vector<16x128xf32>
    %cst_8 = arith.constant 4.471500e-02 : f32
    %14 = vector.broadcast %cst_8 : f32 to vector<16x128xf32>
    %15 = arith.mulf %14, %9 : vector<16x128xf32>
    %cst_9 = arith.constant 1.000000e+00 : f32
    %16 = vector.broadcast %cst_9 : f32 to vector<16x128xf32>
    %17 = arith.addf %16, %15 : vector<16x128xf32>
    %18 = arith.mulf %13, %17 : vector<16x128xf32>
    %19 = math.tanh %18 : vector<16x128xf32>
    %cst_10 = arith.constant 1.000000e+00 : f32
    %20 = vector.broadcast %cst_10 : f32 to vector<16x128xf32>
    %21 = arith.addf %20, %19 : vector<16x128xf32>
    %22 = arith.mulf %11, %21 : vector<16x128xf32>
    %c0_11 = arith.constant 0 : index
    %c0_12 = arith.constant 0 : index
    %23 = vector.load %arg8[%c0_11, %c0_12] : memref<16x32xf32, #tpu.memory_space<vmem>>, vector<16x32xf32>
    %24 = arith.truncf %22 : vector<16x128xf32> to vector<16x128xbf16>
    %c0_13 = arith.constant 0 : index
    %c0_14 = arith.constant 0 : index
    %25 = vector.load %arg5[%c0_13, %c0_14] : memref<128x32xbf16, #tpu.memory_space<vmem>>, vector<128x32xbf16>
    %cst_15 = arith.constant dense<0.000000e+00> : vector<16x32xf32>
    %26 = tpu.matmul %24, %25, %cst_15 {dimension_numbers = #tpu.dot_dimension_numbers<[1], [0], [0], [1], [0, 0, 1, 1], [], []>} : vector<16x128xbf16>, vector<128x32xbf16>, vector<16x32xf32> -> vector<16x32xf32>
    %27 = arith.addf %23, %26 : vector<16x32xf32>
    %c0_16 = arith.constant 0 : index
    %c0_17 = arith.constant 0 : index
    %28 = vector.load %arg8[%c0_16, %c0_17] : memref<16x32xf32, #tpu.memory_space<vmem>>, vector<16x32xf32>
    tpu.vector_store %arg8[%c0_16, %c0_17], %27 {strides = array<i32>} : memref<16x32xf32, #tpu.memory_space<vmem>>, vector<16x32xf32>,
    %c0_i32_18 = arith.constant 0 : i32
    %29 = arith.cmpi eq, %arg1, %c0_i32_18 : i32
    %30 = arith.extui %29 : i1 to i32
    %c0_i32_19 = arith.constant 0 : i32
    %31 = arith.cmpi ne, %30, %c0_i32_19 : i32
    scf.if %31 {
      %c0_20 = arith.constant 0 : index
      %c0_21 = arith.constant 0 : index
      %32 = vector.load %arg8[%c0_20, %c0_21] : memref<16x32xf32, #tpu.memory_space<vmem>>, vector<16x32xf32>
      %c0_22 = arith.constant 0 : index
      %c0_23 = arith.constant 0 : index
      %33 = vector.load %arg7[%c0_22, %c0_23] : memref<16x32xf32, #tpu.memory_space<vmem>>, vector<16x32xf32>
      tpu.vector_store %arg7[%c0_22, %c0_23], %32 {strides = array<i32>} : memref<16x32xf32, #tpu.memory_space<vmem>>, vector<16x32xf32>,
    } else {
    }
    return
  }
  func.func @transform_0(%arg0: i32, %arg1: i32) -> (i32, i32) {
    %c0_i32 = arith.constant 0 : i32
    %c0_i32_0 = arith.constant 0 : i32
    return %arg0, %c0_i32 : i32, i32
  }
  func.func @transform_1(%arg0: i32, %arg1: i32) -> (i32, i32) {
    %c0_i32 = arith.constant 0 : i32
    %c0_i32_0 = arith.constant 0 : i32
    return %c0_i32, %arg1 : i32, i32
  }
  func.func @transform_2(%arg0: i32, %arg1: i32) -> (i32, i32) {
    %c0_i32 = arith.constant 0 : i32
    %c0_i32_0 = arith.constant 0 : i32
    return %c0_i32, %arg1 : i32, i32
  }
  func.func @transform_3(%arg0: i32, %arg1: i32) -> (i32, i32) {
    %c0_i32 = arith.constant 0 : i32
    %c0_i32_0 = arith.constant 0 : i32
    return %arg1, %c0_i32 : i32, i32
  }
  func.func @transform_4(%arg0: i32, %arg1: i32) -> (i32, i32) {
    %c0_i32 = arith.constant 0 : i32
    %c0_i32_0 = arith.constant 0 : i32
    %c0_i32_1 = arith.constant 0 : i32
    return %c0_i32, %c0_i32_0 : i32, i32
  }
  func.func @transform_5(%arg0: i32, %arg1: i32) -> (i32, i32) {
    %c0_i32 = arith.constant 0 : i32
    %c0_i32_0 = arith.constant 0 : i32
    return %arg0, %c0_i32 : i32, i32
  }
}

</mosaic_0001>

<llo_original>
// kernel: _mlp_pallas_call.1
$region0: #{_mlp_pallas_call.1}
  #allocation0 [shape = 'u32[]', space=smem, size = 0x4, offset = 0x4, fixed_abs, tag = 'smem constant byte address 0x4 - core index']
  #allocation1 [shape = 'u32[144,128]{1,0:T(1,128)}', space=vmem, size = 0x12000, scoped, tag = 'internal scratch']
  #allocation2 [shape = 'f32[16,32]{1,0:T(8,128)}', space=vmem, size = 0x2000, scoped, tag = 'scratch operand']
  %s0 = inlined_call_operand.vmem [shape: bf16[16,32], index: 0, kind: input, shape index: {}]
  %s1 = inlined_call_operand.vmem [shape: bf16[32,128], index: 1, kind: input, shape index: {}]
  %s2 = inlined_call_operand.vmem [shape: f32[1,128], index: 2, kind: input, shape index: {}]
  %s3 = inlined_call_operand.vmem [shape: bf16[128,32], index: 3, kind: input, shape index: {}]
  %s4 = inlined_call_operand.vmem [shape: f32[1,32], index: 4, kind: input, shape index: {}]
  %s5 = inlined_call_operand.hbm [shape: f32[16,32], index: 5, kind: output, shape index: {}]
  %s6 = sld [smem:[#allocation0]]
  $region38: #{_mlp_pallas_call.1} parent=0
    _
  %s8 = ssub.s32 1, %s6
  %s9 = scalar_select 0, %s8, %s6
  $region1: #{_mlp_pallas_call.1} parent=0
    #allocation3 [shape = 'u8[8192]{0}', space=vmem, size = 0x2000, scoped, tag = 'output window, operand 0, single buffered']
    #allocation4 [shape = 's32[1]{0}', space=sflag, size = 0x4, scoped, tag = 'scoped memory for _mlp_pallas_call.1']
    %10 = vsyncpa [#allocation4], 0
    // Predicated region
    $region2: #{_mlp_pallas_call.1} parent=1 // pred_check
      _
    $region3: #{_mlp_pallas_call.1} parent=1 // pred_check_branch
      %12 = sbr.rel (0) target = $region5
    $region4: #{_mlp_pallas_call.1} parent=1 // pred_region
      _
    $region5: #{_mlp_pallas_call.1} parent=1 // pred_fallthru
      _
    // Predicated region
    $region6: #{_mlp_pallas_call.1} parent=1 // pred_check
      _
    $region7: #{_mlp_pallas_call.1} parent=1 // pred_check_branch
      %14 = sbr.rel (0) target = $region9
    $region8: #{_mlp_pallas_call.1} parent=1 // pred_region
      _
    $region9: #{_mlp_pallas_call.1} parent=1 // pred_fallthru
      _
    // Predicated region
    $region10: #{_mlp_pallas_call.1} parent=1 // pred_check
      _
    $region11: #{_mlp_pallas_call.1} parent=1 // pred_check_branch
      %16 = sbr.rel (0) target = $region13
    $region12: #{_mlp_pallas_call.1} parent=1 // pred_region
      _
    $region13: #{_mlp_pallas_call.1} parent=1 // pred_fallthru
      _
    // Predicated region
    $region14: #{_mlp_pallas_call.1} parent=1 // pred_check
      _
    $region15: #{_mlp_pallas_call.1} parent=1 // pred_check_branch
      %18 = sbr.rel (0) target = $region17
    $region16: #{_mlp_pallas_call.1} parent=1 // pred_region
      _
    $region17: #{_mlp_pallas_call.1} parent=1 // pred_fallthru
      _
    // Predicated region
    $region18: #{_mlp_pallas_call.1} parent=1 // pred_check
      _
    $region19: #{_mlp_pallas_call.1} parent=1 // pred_check_branch
      %20 = sbr.rel (0) target = $region21
    $region20: #{_mlp_pallas_call.1} parent=1 // pred_region
      _
    $region21: #{_mlp_pallas_call.1} parent=1 // pred_fallthru
      _
    %p22 = scmp.eq.s32.totalorder 0, 0
    // Predicated region
    $region22: #{_mlp_pallas_call.1} parent=1 // pred_check
      %p23 = pneg %p22
    $region23: #{_mlp_pallas_call.1} parent=1 // pred_check_branch
      %25 = sbr.rel (%p23) target = $region25
    $region24: #{_mlp_pallas_call.1} parent=1 // pred_region
      %v26 = vld [vmem:[%s4] sm:$0x1]
      %v28 = vlaneseq
      %v29 = vshrl.u32 %v28, 7
      %v30 = vsub.s32 0, %v29
      %v31 = vrot.slane %v26, %v30
      %vm33 = vcmask 261120
      %34 = vst.msk [vmem:[#allocation2] sm:$0xff] %vm33, %v31
      %35 = vst.msk [vmem:[#allocation2 + $0x8] sm:$0xff] %vm33, %v31
    $region25: #{_mlp_pallas_call.1} parent=1 // pred_fallthru
      _
    %v36 = vld [vmem:[%s0] sm:$0xf]
    %v37 = vld [vmem:[%s0 + $0x4] sm:$0xf]
    %v38 = vld [vmem:[%s1] sm:$0xf]
    %v39 = vld [vmem:[%s1 + $0x4] sm:$0xf]
    %v40 = vld [vmem:[%s1 + $0x8] sm:$0xf]
    %v41 = vld [vmem:[%s1 + $0xc] sm:$0xf]
    %v42 = vld [vmem:[%s2] sm:$0x1]
    %v44 = vlaneseq
    %v45 = vshrl.u32 %v44, 7
    %v46 = vsub.s32 0, %v45
    %v47 = vrot.slane %v42, %v46
    %v51 = vunpack.c.l.b16 %v36
    %v52 = vunpack.c.l.b16 %v37
    %v53 = vpack.c.b16 %v52, %v51
    %v58 = vunpack.c.l.b16 %v38
    %v59 = vunpack.c.l.b16 %v39
    %v60 = vunpack.c.l.b16 %v40
    %v61 = vunpack.c.l.b16 %v41
    %v62 = vpack.c.b16 %v59, %v58
    %v63 = vpack.c.b16 %v61, %v60
    %vm66 = vcmask 261120
    %v68 = vsel %vm66, %v53, 0
    %70 = vmatprep.subr.bf16.mxu0 0
    %71 = vmatpush1.bf16.msra.mxu0 0
    %72 = vmatprep.subr.bf16.mxu0 0
    %73 = vmatpush1.bf16.msra.mxu0 0
    %74 = vmatprep.subr.bf16.mxu0 0
    %75 = vmatpush1.bf16.msra.mxu0 0
    %76 = vmatprep.subr.bf16.mxu0 0
    %77 = vmatpush1.bf16.msra.mxu0 0
    %78 = vmatprep.subr.bf16.mxu0 0
    %79 = vmatpush1.bf16.msra.mxu0 0
    %80 = vmatprep.subr.bf16.mxu0 0
    %81 = vmatpush1.bf16.msra.mxu0 0
    %82 = vmatprep.subr.bf16.mxu0 0
    %83 = vmatpush1.bf16.msra.mxu0 %v63
    %84 = vmatprep.subr.bf16.mxu0 0
    %85 = vmatpush1.bf16.msra.mxu0 %v62
    %86 = vmatprep.subr.bf16.mxu0 0
    %87 = vmatpush2.bf16.msra.mxu0 0
    %88 = vmatprep.subr.bf16.mxu0 0
    %89 = vmatpush2.bf16.msra.mxu0 0
    %90 = vmatprep.subr.bf16.mxu0 0
    %91 = vmatpush2.bf16.msra.mxu0 0
    %92 = vmatprep.subr.bf16.mxu0 0
    %93 = vmatpush2.bf16.msra.mxu0 0
    %94 = vmatprep.subr.bf16.mxu0 0
    %95 = vmatpush2.bf16.msra.mxu0 0
    %96 = vmatprep.subr.bf16.mxu0 0
    %97 = vmatpush2.bf16.msra.mxu0 0
    %98 = vmatprep.subr.bf16.mxu0 0
    %99 = vmatpush2.bf16.msra.mxu0 0
    %100 = vmatprep.subr.bf16.mxu0 0
    %101 = vmatpush2.bf16.msra.mxu0 0
    %102 = vmatprep.mubr.bf16.mxu0 0
    %103 = vmatmul.mubr.bf16.gmra.mxu0 %v68
    %v104 = vpop.f32.mrf.mxu0
    %v105 = vadd.f32 %v47, %v104
    %v106 = vpop.f32.mrf.mxu0
    %v107 = vpop.f32.mrf.mxu0
    %v108 = vadd.f32 %v47, %v107
    %v109 = vpop.f32.mrf.mxu0
    %110 = vdwg.mxu0
    %v111 = vmul.f32 %v105, %v105
    %v112 = vmul.f32 %v108, %v108
    %v113 = vmul.f32 %v105, 0.5
    %v114 = vmul.f32 %v108, 0.5
    %v115 = vmul.f32 %v105, 0.7978846
    %v116 = vmul.f32 %v108, 0.7978846
    %v117 = vmul.f32 %v111, 0.044715
    %v118 = vmul.f32 %v112, 0.044715
    %v119 = vadd.f32 %v117, 1.0
    %v120 = vadd.f32 %v118, 1.0
    %v121 = vmul.f32 %v115, %v119
    %v122 = vmul.f32 %v116, %v120
    %v123 = vtanh.pop %v121
    %v124 = vtanh.pop %v122
    %v125 = vadd.f32 %v123, 1.0
    %v126 = vadd.f32 %v124, 1.0
    %v127 = vmul.f32 %v113, %v125
    %v128 = vmul.f32 %v114, %v126
    %v129 = vld [vmem:[#allocation2] sm:$0xff]
    %v130 = vld [vmem:[#allocation2 + $0x8] sm:$0xff]
    %v131 = vpack.c.bf16 %v128, %v127
    %v132 = vld [vmem:[%s3] sm:$0xf]
    %v133 = vld [vmem:[%s3 + $0x4] sm:$0xf]
    %v134 = vld [vmem:[%s3 + $0x8] sm:$0xf]
    %v135 = vld [vmem:[%s3 + $0xc] sm:$0xf]
    %v136 = vld [vmem:[%s3 + $0x10] sm:$0xf]
    %v137 = vld [vmem:[%s3 + $0x14] sm:$0xf]
    %v138 = vld [vmem:[%s3 + $0x18] sm:$0xf]
    %v139 = vld [vmem:[%s3 + $0x1c] sm:$0xf]
    %v140 = vld [vmem:[%s3 + $0x20] sm:$0xf]
    %v141 = vld [vmem:[%s3 + $0x24] sm:$0xf]
    %v142 = vld [vmem:[%s3 + $0x28] sm:$0xf]
    %v143 = vld [vmem:[%s3 + $0x2c] sm:$0xf]
    %v144 = vld [vmem:[%s3 + $0x30] sm:$0xf]
    %v145 = vld [vmem:[%s3 + $0x34] sm:$0xf]
    %v146 = vld [vmem:[%s3 + $0x38] sm:$0xf]
    %v147 = vld [vmem:[%s3 + $0x3c] sm:$0xf]
    %v164 = vunpack.c.l.b16 %v132
    %v165 = vunpack.c.l.b16 %v133
    %v166 = vunpack.c.l.b16 %v134
    %v167 = vunpack.c.l.b16 %v135
    %v168 = vunpack.c.l.b16 %v136
    %v169 = vunpack.c.l.b16 %v137
    %v170 = vunpack.c.l.b16 %v138
    %v171 = vunpack.c.l.b16 %v139
    %v172 = vunpack.c.l.b16 %v140
    %v173 = vunpack.c.l.b16 %v141
    %v174 = vunpack.c.l.b16 %v142
    %v175 = vunpack.c.l.b16 %v143
    %v176 = vunpack.c.l.b16 %v144
    %v177 = vunpack.c.l.b16 %v145
    %v178 = vunpack.c.l.b16 %v146
    %v179 = vunpack.c.l.b16 %v147
    %v180 = vpack.c.b16 %v165, %v164
    %v181 = vpack.c.b16 %v167, %v166
    %v182 = vpack.c.b16 %v169, %v168
    %v183 = vpack.c.b16 %v171, %v170
    %v184 = vpack.c.b16 %v173, %v172
    %v185 = vpack.c.b16 %v175, %v174
    %v186 = vpack.c.b16 %v177, %v176
    %v187 = vpack.c.b16 %v179, %v178
    %196 = vmatprep.subr.bf16.mxu0 0
    %197 = vmatpush1.bf16.msra.mxu0 %v187
    %198 = vmatprep.subr.bf16.mxu0 0
    %199 = vmatpush1.bf16.msra.mxu0 %v186
    %200 = vmatprep.subr.bf16.mxu0 0
    %201 = vmatpush1.bf16.msra.mxu0 %v185
    %202 = vmatprep.subr.bf16.mxu0 0
    %203 = vmatpush1.bf16.msra.mxu0 %v184
    %204 = vmatprep.subr.bf16.mxu0 0
    %205 = vmatpush1.bf16.msra.mxu0 %v183
    %206 = vmatprep.subr.bf16.mxu0 0
    %207 = vmatpush1.bf16.msra.mxu0 %v182
    %208 = vmatprep.subr.bf16.mxu0 0
    %209 = vmatpush1.bf16.msra.mxu0 %v181
    %210 = vmatprep.subr.bf16.mxu0 0
    %211 = vmatpush1.bf16.msra.mxu0 %v180
    %212 = vmatprep.subr.bf16.mxu0 0
    %213 = vmatpush2.bf16.msra.mxu0 0
    %214 = vmatprep.subr.bf16.mxu0 0
    %215 = vmatpush2.bf16.msra.mxu0 0
    %216 = vmatprep.subr.bf16.mxu0 0
    %217 = vmatpush2.bf16.msra.mxu0 0
    %218 = vmatprep.subr.bf16.mxu0 0
    %219 = vmatpush2.bf16.msra.mxu0 0
    %220 = vmatprep.subr.bf16.mxu0 0
    %221 = vmatpush2.bf16.msra.mxu0 0
    %222 = vmatprep.subr.bf16.mxu0 0
    %223 = vmatpush2.bf16.msra.mxu0 0
    %224 = vmatprep.subr.bf16.mxu0 0
    %225 = vmatpush2.bf16.msra.mxu0 0
    %226 = vmatprep.subr.bf16.mxu0 0
    %227 = vmatpush2.bf16.msra.mxu0 0
    %228 = vmatprep.mubr.bf16.mxu0 0
    %229 = vmatmul.mubr.bf16.gmra.mxu0 %v131
    %v230 = vpop.f32.mrf.mxu0
    %v231 = vadd.f32 0.0, %v230
    %v232 = vpop.f32.mrf.mxu0
    %v233 = vpop.f32.mrf.mxu0
    %v234 = vadd.f32 0.0, %v233
    %v235 = vpop.f32.mrf.mxu0
    %236 = vdwg.mxu0
    %v237 = vadd.f32 %v129, %v231
    %v238 = vadd.f32 %v130, %v234
    %239 = vst.msk [vmem:[#allocation2] sm:$0xff] %vm66, %v237
    %240 = vst.msk [vmem:[#allocation2 + $0x8] sm:$0xff] %vm66, %v238
    // Predicated region
    $region26: #{_mlp_pallas_call.1} parent=1 // pred_check
      %p241 = pneg %p22
    $region27: #{_mlp_pallas_call.1} parent=1 // pred_check_branch
      %243 = sbr.rel (%p241) target = $region29
    $region28: #{_mlp_pallas_call.1} parent=1 // pred_region
      %v244 = vld [vmem:[#allocation2] sm:$0xff]
      %v245 = vld [vmem:[#allocation2 + $0x8] sm:$0xff]
      %246 = vst.msk [vmem:[#allocation3] sm:$0xff] %vm66, %v244
      %247 = vst.msk [vmem:[#allocation3 + $0x8] sm:$0xff] %vm66, %v245
    $region29: #{_mlp_pallas_call.1} parent=1 // pred_fallthru
      _
    // Predicated region
    $region30: #{_mlp_pallas_call.1} parent=1 // pred_check
      _
    $region31: #{_mlp_pallas_call.1} parent=1 // pred_check_branch
      %249 = sbr.rel (0) target = $region33
    $region32: #{_mlp_pallas_call.1} parent=1 // pred_region
      %s251 = ssub.s32 256, 256
      %252 = vsyncadd [#allocation4], %s251
      %s253 = sshll.u32 [#allocation3], 4
      %s254 = int_to_ptr.vmem [resolvable:$true] %s253
      %259 = dma.vmem_to_hbm [thread:$0]  %s254, 256, %s5, [#allocation4], 128, 128, 8
    $region33: #{_mlp_pallas_call.1} parent=1 // pred_fallthru
      _
    // Predicated region
    $region34: #{_mlp_pallas_call.1} parent=1 // pred_check
      _
    $region35: #{_mlp_pallas_call.1} parent=1 // pred_check_branch
      %261 = sbr.rel (0) target = $region37
    $region36: #{_mlp_pallas_call.1} parent=1 // pred_region
      %262 = dma.done [#allocation4], 256
    $region37: #{_mlp_pallas_call.1} parent=1 // pred_fallthru
      _
    %263 = vsyncpa [#allocation4], 1

</llo_original>
